<compile_context>
chip_gen: v6e
topology: v6e:2x2x1
jax: 0.10.0
libtpu: 0.0.40
codegen_flags: <defaults>
</compile_context>

<pallas_src>
import jax
import jax.numpy as jnp
from jax.experimental import pallas as pl
from jax.experimental.pallas import tpu as pltpu


# ----------------------------------------------------------------------------
# Fused Pallas kernel: GAT layer 1 + ELU + GAT layer 2 + log_softmax
# ----------------------------------------------------------------------------
def _make_fused_gat_kernel(n_feat: int, hidden: int, num_classes: int):
    neg_inf = -1e30  # Python float literal (NOT a captured jnp array constant)

    def kernel(x_ref, adj_ref, p1_ref, p2_ref, out_ref):
        n = x_ref.shape[0]
        # Edge mask as an additive bias, computed ONCE, shared by both layers.
        mask_bias = jnp.where(adj_ref[...] > 0.0, 0.0, neg_inf)     # [N, N]
        ones_col = jnp.ones((n, 1), dtype=jnp.float32)              # MXU row-sum helper

        def gat_layer(x, p_ref, f_in, f_out):
            # Packed slab layout (see pack_layer_params):
            #   rows 0..f_in-1,  cols 0..f_out-1 : W
            #   row  f_in,       cols 0..f_out-1 : bias
            #   rows 0..f_out-1, col  f_out      : a_dst
            #   rows 0..f_out-1, col  f_out+1    : a_src
            w = p_ref[0:f_in, 0:f_out]
            b = p_ref[f_in:f_in + 1, 0:f_out]
            a_cat = p_ref[0:f_out, f_out:f_out + 2]

            h = jnp.dot(x, w, preferred_element_type=jnp.float32)           # [N, f_out]
            # Both attention logits with ONE MXU dot: col0 = a_dst, col1 = a_src.
            alpha = jnp.dot(h, a_cat, preferred_element_type=jnp.float32)   # [N, 2]
            # e[i, j] = alpha_dst[i] + alpha_src[j]; one tiny [N,1]->[1,N] transpose.
            e = alpha[:, 0:1] + jnp.transpose(alpha[:, 1:2])                # [N, N]
            e = jnp.maximum(e, 0.2 * e)                                     # LeakyReLU(0.2)
            e = e + mask_bias                                               # mask non-edges
            # Masked softmax over incoming neighbours (axis=1). Masked entries
            # give exp(-1e30 - m) == 0 exactly -> no second mask needed.
            m = jnp.max(e, axis=1, keepdims=True)
            p = jnp.exp(e - m)
            num = jnp.dot(p, h, preferred_element_type=jnp.float32)            # [N, f_out]
            denom = jnp.dot(p, ones_col, preferred_element_type=jnp.float32)   # [N, 1] (MXU)
            # Normalize AFTER aggregation; exact EUP reciprocal, not an f32 divide.
            return num * pl.reciprocal(denom) + b

        # ---- Layer 1 + ELU (intermediate never leaves VMEM) ----
        z1 = gat_layer(x_ref[...], p1_ref, n_feat, hidden)
        h1 = jnp.where(z1 > 0, z1, jnp.exp(jnp.minimum(z1, 0.0)) - 1.0)

        # ---- Layer 2 + log_softmax over the num_classes lanes ----
        z2 = gat_layer(h1, p2_ref, hidden, num_classes)
        mm = jnp.max(z2, axis=1, keepdims=True)
        lse = jnp.log(jnp.sum(jnp.exp(z2 - mm), axis=1, keepdims=True)) + mm
        out_ref[...] = z2 - lse

    return kernel


# ----------------------------------------------------------------------------
# Parameter packing (done once, outside the jitted forward)
# ----------------------------------------------------------------------------
def pack_layer_params(w, a_src, a_dst, b):
    """Pack W, bias and both attention vectors into one f32 slab."""
    f_in, f_out = w.shape
    rows = max(f_in + 1, f_out)
    slab = jnp.zeros((rows, f_out + 2), dtype=jnp.float32)
    slab = slab.at[0:f_in, 0:f_out].set(w)
    slab = slab.at[f_in, 0:f_out].set(jnp.reshape(b, (-1,)))
    slab = slab.at[0:f_out, f_out].set(jnp.reshape(a_dst, (-1,)))
    slab = slab.at[0:f_out, f_out + 1].set(jnp.reshape(a_src, (-1,)))
    return slab


# ----------------------------------------------------------------------------
# Wrapper
# ----------------------------------------------------------------------------
@jax.jit
def my_gat_forward(x, adj, p1, p2):
    n, n_feat = x.shape
    hidden = p1.shape[1] - 2
    num_classes = p2.shape[1] - 2
    vmem = pl.BlockSpec(memory_space=pltpu.MemorySpace.VMEM)
    return pl.pallas_call(
        _make_fused_gat_kernel(n_feat, hidden, num_classes),
        out_shape=jax.ShapeDtypeStruct((n, num_classes), jnp.float32),
        in_specs=[vmem, vmem, vmem, vmem],
        out_specs=vmem,
    )(x, adj, p1, p2)


# ----------------------------------------------------------------------------
# Pure-JAX reference (same dense-mask math) for correctness checking
# ----------------------------------------------------------------------------
def _ref_layer(x, adj, w, a_src, a_dst, bias, activation):
    h = x @ w
    alpha_src = jnp.sum(h * a_src, axis=1, keepdims=True)
    alpha_dst = jnp.sum(h * a_dst, axis=1, keepdims=True)
    e = alpha_dst + alpha_src.T
    e = jnp.where(e > 0, e, 0.2 * e)
    mask = adj > 0.0
    e = jnp.where(mask, e, -1e30)
    p = jnp.exp(e - jnp.max(e, axis=1, keepdims=True))
    p = jnp.where(mask, p, 0.0)
    attn = p / jnp.sum(p, axis=1, keepdims=True)
    out = attn @ h + bias
    if activation == "elu":
        out = jnp.where(out > 0, out, jnp.exp(jnp.minimum(out, 0.0)) - 1.0)
    elif activation == "log_softmax":
        out = out - jax.nn.logsumexp(out, axis=1, keepdims=True)
    return out


def ref_forward(x, adj, params):
    h = _ref_layer(x, adj, params["w1"], params["as1"], params["ad1"],
                   params["b1"], "elu")
    return _ref_layer(h, adj, params["w2"], params["as2"], params["ad2"],
                      params["b2"], "log_softmax")


# ----------------------------------------------------------------------------
# Main
# ----------------------------------------------------------------------------
if __name__ == "__main__":
    N_NODES = 16        # number of graph nodes
    N_FEAT = 8          # input feature dim (n_feat)
    HIDDEN = 16         # GATConv(n_feat, 16)
    NUM_CLASSES = 4     # GATConv(16, num_classes)
    N_EDGES = 40

    key = jax.random.PRNGKey(0)
    k_x, k_src, k_dst, k_w1, k_a1s, k_a1d, k_w2, k_a2s, k_a2d = jax.random.split(key, 9)

    # Node features (self.d) and a random edge_index.
    x = jax.random.normal(k_x, (N_NODES, N_FEAT), dtype=jnp.float32)
    src = jax.random.randint(k_src, (N_EDGES,), 0, N_NODES)
    dst = jax.random.randint(k_dst, (N_EDGES,), 0, N_NODES)

    # Dense adjacency mask: adj[dst, src] = 1, plus self loops (GATConv default).
    # TODO(synk): at large N ship adj as int8 to cut the dominant HBM traffic.
    adj = jnp.zeros((N_NODES, N_NODES), dtype=jnp.float32)
    adj = adj.at[dst, src].set(1.0)
    diag = jnp.arange(N_NODES)
    adj = adj.at[diag, diag].set(1.0)
    # Softmax-denominator invariant: every row must have at least one edge.
    assert bool(jnp.all(jnp.sum(adj, axis=1) > 0))

    # Deterministic parameter init (shapes from GATConv with heads=1).
    def init_w(k, fan_in, fan_out):
        scale = jnp.sqrt(2.0 / (fan_in + fan_out)).astype(jnp.float32)
        return scale * jax.random.normal(k, (fan_in, fan_out), dtype=jnp.float32)

    params = {
        "w1": init_w(k_w1, N_FEAT, HIDDEN),
        "as1": 0.1 * jax.random.normal(k_a1s, (1, HIDDEN), dtype=jnp.float32),
        "ad1": 0.1 * jax.random.normal(k_a1d, (1, HIDDEN), dtype=jnp.float32),
        "b1": jnp.zeros((1, HIDDEN), dtype=jnp.float32),
        "w2": init_w(k_w2, HIDDEN, NUM_CLASSES),
        "as2": 0.1 * jax.random.normal(k_a2s, (1, NUM_CLASSES), dtype=jnp.float32),
        "ad2": 0.1 * jax.random.normal(k_a2d, (1, NUM_CLASSES), dtype=jnp.float32),
        "b2": jnp.zeros((1, NUM_CLASSES), dtype=jnp.float32),
    }

    # Pack small params into one slab per layer (done once, outside the jit).
    p1 = pack_layer_params(params["w1"], params["as1"], params["ad1"], params["b1"])
    p2 = pack_layer_params(params["w2"], params["as2"], params["ad2"], params["b2"])

    out = my_gat_forward(x, adj, p1, p2)
    out = jax.block_until_ready(out)

    expected = ref_forward(x, adj, params)
    assert out.shape == (N_NODES, NUM_CLASSES)
    assert bool(jnp.all(jnp.isfinite(out)))
    assert bool(jnp.allclose(out, expected, atol=1e-4, rtol=1e-4))
    # rows of log_softmax must exp-sum to 1
    assert bool(jnp.allclose(jnp.sum(jnp.exp(out), axis=1), 1.0, atol=1e-4))

    print("KERNEL_OK")
</pallas_src>

<mosaic_0001>
module attributes {stable_mosaic.version = 11 : i64} {
  func.func @kernel(%arg0: memref<16x8xf32, #tpu.memory_space<vmem>>, %arg1: memref<16x16xf32, #tpu.memory_space<vmem>>, %arg2: memref<16x18xf32, #tpu.memory_space<vmem>>, %arg3: memref<17x6xf32, #tpu.memory_space<vmem>>, %arg4: memref<16x4xf32, #tpu.memory_space<vmem>>) attributes {dimension_semantics = [], scalar_prefetch = 0 : i64, scratch_operands = 0 : i64, tpu.core_type = #tpu.core_type<tc>} {
    %c0 = arith.constant 0 : index
    %c0_0 = arith.constant 0 : index
    %0 = vector.load %arg1[%c0, %c0_0] : memref<16x16xf32, #tpu.memory_space<vmem>>, vector<16x16xf32>
    %cst = arith.constant 0.000000e+00 : f32
    %1 = vector.broadcast %cst : f32 to vector<16x16xf32>
    %2 = arith.cmpf ogt, %0, %1 : vector<16x16xf32>
    %cst_1 = arith.constant 0.000000e+00 : f32
    %cst_2 = arith.constant -1.000000e+30 : f32
    %3 = vector.broadcast %cst_1 : f32 to vector<16x16xf32>
    %4 = vector.broadcast %cst_2 : f32 to vector<16x16xf32>
    %5 = arith.select %2, %3, %4 : vector<16x16xi1>, vector<16x16xf32>
    %cst_3 = arith.constant 1.000000e+00 : f32
    %6 = vector.broadcast %cst_3 : f32 to vector<16x1xf32>
    %c0_4 = arith.constant 0 : index
    %c0_5 = arith.constant 0 : index
    %7 = vector.load %arg0[%c0_4, %c0_5] : memref<16x8xf32, #tpu.memory_space<vmem>>, vector<16x8xf32>
    %c0_6 = arith.constant 0 : index
    %c0_7 = arith.constant 0 : index
    %8 = vector.load %arg2[%c0_6, %c0_7] : memref<16x18xf32, #tpu.memory_space<vmem>>, vector<8x16xf32>
    %c8 = arith.constant 8 : index
    %c0_8 = arith.constant 0 : index
    %9 = vector.load %arg2[%c8, %c0_8] : memref<16x18xf32, #tpu.memory_space<vmem>>, vector<1x16xf32>
    %c0_9 = arith.constant 0 : index
    %c16 = arith.constant 16 : index
    %10 = vector.load %arg2[%c0_9, %c16] : memref<16x18xf32, #tpu.memory_space<vmem>>, vector<16x2xf32>
    %cst_10 = arith.constant dense<0.000000e+00> : vector<16x16xf32>
    %11 = tpu.matmul %7, %8, %cst_10 {dimension_numbers = #tpu.dot_dimension_numbers<[1], [0], [0], [1], [0, 0, 1, 1], [], []>} : vector<16x8xf32>, vector<8x16xf32>, vector<16x16xf32> -> vector<16x16xf32>
    %cst_11 = arith.constant dense<0.000000e+00> : vector<16x2xf32>
    %12 = tpu.matmul %11, %10, %cst_11 {dimension_numbers = #tpu.dot_dimension_numbers<[1], [0], [0], [1], [0, 0, 1, 1], [], []>} : vector<16x16xf32>, vector<16x2xf32>, vector<16x2xf32> -> vector<16x2xf32>
    %13 = vector.extract_strided_slice %12 {offsets = [0, 0], sizes = [16, 1], strides = [1, 1]} : vector<16x2xf32> to vector<16x1xf32>
    %14 = vector.extract_strided_slice %12 {offsets = [0, 1], sizes = [16, 1], strides = [1, 1]} : vector<16x2xf32> to vector<16x1xf32>
    %15 = tpu.transpose %14, [1, 0] : vector<16x1xf32> -> vector<1x16xf32>
    %16 = vector.broadcast %13 : vector<16x1xf32> to vector<16x16xf32>
    %17 = vector.broadcast %15 : vector<1x16xf32> to vector<16x16xf32>
    %18 = arith.addf %16, %17 : vector<16x16xf32>
    %cst_12 = arith.constant 2.000000e-01 : f32
    %19 = vector.broadcast %cst_12 : f32 to vector<16x16xf32>
    %20 = arith.mulf %19, %18 : vector<16x16xf32>
    %21 = arith.maximumf %18, %20 : vector<16x16xf32>
    %22 = arith.addf %21, %5 : vector<16x16xf32>
    %cst_13 = arith.constant dense<0xFF800000> : vector<16xf32>
    %23 = vector.multi_reduction <maximumf>, %22, %cst_13 [1] : vector<16x16xf32> to vector<16xf32>
    %24 = vector.shape_cast %23 : vector<16xf32> to vector<16x1xf32>
    %25 = vector.broadcast %24 : vector<16x1xf32> to vector<16x16xf32>
    %26 = arith.subf %22, %25 : vector<16x16xf32>
    %27 = math.exp %26 : vector<16x16xf32>
    %cst_14 = arith.constant dense<0.000000e+00> : vector<16x16xf32>
    %28 = tpu.matmul %27, %11, %cst_14 {dimension_numbers = #tpu.dot_dimension_numbers<[1], [0], [0], [1], [0, 0, 1, 1], [], []>} : vector<16x16xf32>, vector<16x16xf32>, vector<16x16xf32> -> vector<16x16xf32>
    %cst_15 = arith.constant dense<0.000000e+00> : vector<16x1xf32>
    %29 = tpu.matmul %27, %6, %cst_15 {dimension_numbers = #tpu.dot_dimension_numbers<[1], [0], [0], [1], [0, 0, 1, 1], [], []>} : vector<16x16xf32>, vector<16x1xf32>, vector<16x1xf32> -> vector<16x1xf32>
    %30 = tpu.reciprocal %29 : vector<16x1xf32> -> vector<16x1xf32>
    %31 = vector.broadcast %30 : vector<16x1xf32> to vector<16x16xf32>
    %32 = arith.mulf %28, %31 : vector<16x16xf32>
    %33 = vector.broadcast %9 : vector<1x16xf32> to vector<16x16xf32>
    %34 = arith.addf %32, %33 : vector<16x16xf32>
    %cst_16 = arith.constant 0.000000e+00 : f32
    %35 = vector.broadcast %cst_16 : f32 to vector<16x16xf32>
    %36 = arith.cmpf ogt, %34, %35 : vector<16x16xf32>
    %cst_17 = arith.constant 0.000000e+00 : f32
    %37 = vector.broadcast %cst_17 : f32 to vector<16x16xf32>
    %38 = arith.minimumf %34, %37 : vector<16x16xf32>
    %39 = math.exp %38 : vector<16x16xf32>
    %cst_18 = arith.constant 1.000000e+00 : f32
    %40 = vector.broadcast %cst_18 : f32 to vector<16x16xf32>
    %41 = arith.subf %39, %40 : vector<16x16xf32>
    %42 = arith.select %36, %34, %41 : vector<16x16xi1>, vector<16x16xf32>
    %c0_19 = arith.constant 0 : index
    %c0_20 = arith.constant 0 : index
    %43 = vector.load %arg3[%c0_19, %c0_20] : memref<17x6xf32, #tpu.memory_space<vmem>>, vector<16x4xf32>
    %c16_21 = arith.constant 16 : index
    %c0_22 = arith.constant 0 : index
    %44 = vector.load %arg3[%c16_21, %c0_22] : memref<17x6xf32, #tpu.memory_space<vmem>>, vector<1x4xf32>
    %c0_23 = arith.constant 0 : index
    %c4 = arith.constant 4 : index
    %45 = vector.load %arg3[%c0_23, %c4] : memref<17x6xf32, #tpu.memory_space<vmem>>, vector<4x2xf32>
    %cst_24 = arith.constant dense<0.000000e+00> : vector<16x4xf32>
    %46 = tpu.matmul %42, %43, %cst_24 {dimension_numbers = #tpu.dot_dimension_numbers<[1], [0], [0], [1], [0, 0, 1, 1], [], []>} : vector<16x16xf32>, vector<16x4xf32>, vector<16x4xf32> -> vector<16x4xf32>
    %cst_25 = arith.constant dense<0.000000e+00> : vector<16x2xf32>
    %47 = tpu.matmul %46, %45, %cst_25 {dimension_numbers = #tpu.dot_dimension_numbers<[1], [0], [0], [1], [0, 0, 1, 1], [], []>} : vector<16x4xf32>, vector<4x2xf32>, vector<16x2xf32> -> vector<16x2xf32>
    %48 = vector.extract_strided_slice %47 {offsets = [0, 0], sizes = [16, 1], strides = [1, 1]} : vector<16x2xf32> to vector<16x1xf32>
    %49 = vector.extract_strided_slice %47 {offsets = [0, 1], sizes = [16, 1], strides = [1, 1]} : vector<16x2xf32> to vector<16x1xf32>
    %50 = tpu.transpose %49, [1, 0] : vector<16x1xf32> -> vector<1x16xf32>
    %51 = vector.broadcast %48 : vector<16x1xf32> to vector<16x16xf32>
    %52 = vector.broadcast %50 : vector<1x16xf32> to vector<16x16xf32>
    %53 = arith.addf %51, %52 : vector<16x16xf32>
    %cst_26 = arith.constant 2.000000e-01 : f32
    %54 = vector.broadcast %cst_26 : f32 to vector<16x16xf32>
    %55 = arith.mulf %54, %53 : vector<16x16xf32>
    %56 = arith.maximumf %53, %55 : vector<16x16xf32>
    %57 = arith.addf %56, %5 : vector<16x16xf32>
    %cst_27 = arith.constant dense<0xFF800000> : vector<16xf32>
    %58 = vector.multi_reduction <maximumf>, %57, %cst_27 [1] : vector<16x16xf32> to vector<16xf32>
    %59 = vector.shape_cast %58 : vector<16xf32> to vector<16x1xf32>
    %60 = vector.broadcast %59 : vector<16x1xf32> to vector<16x16xf32>
    %61 = arith.subf %57, %60 : vector<16x16xf32>
    %62 = math.exp %61 : vector<16x16xf32>
    %cst_28 = arith.constant dense<0.000000e+00> : vector<16x4xf32>
    %63 = tpu.matmul %62, %46, %cst_28 {dimension_numbers = #tpu.dot_dimension_numbers<[1], [0], [0], [1], [0, 0, 1, 1], [], []>} : vector<16x16xf32>, vector<16x4xf32>, vector<16x4xf32> -> vector<16x4xf32>
    %cst_29 = arith.constant dense<0.000000e+00> : vector<16x1xf32>
    %64 = tpu.matmul %62, %6, %cst_29 {dimension_numbers = #tpu.dot_dimension_numbers<[1], [0], [0], [1], [0, 0, 1, 1], [], []>} : vector<16x16xf32>, vector<16x1xf32>, vector<16x1xf32> -> vector<16x1xf32>
    %65 = tpu.reciprocal %64 : vector<16x1xf32> -> vector<16x1xf32>
    %66 = vector.broadcast %65 : vector<16x1xf32> to vector<16x4xf32>
    %67 = arith.mulf %63, %66 : vector<16x4xf32>
    %68 = vector.broadcast %44 : vector<1x4xf32> to vector<16x4xf32>
    %69 = arith.addf %67, %68 : vector<16x4xf32>
    %cst_30 = arith.constant dense<0xFF800000> : vector<16xf32>
    %70 = vector.multi_reduction <maximumf>, %69, %cst_30 [1] : vector<16x4xf32> to vector<16xf32>
    %71 = vector.shape_cast %70 : vector<16xf32> to vector<16x1xf32>
    %72 = vector.broadcast %71 : vector<16x1xf32> to vector<16x4xf32>
    %73 = arith.subf %69, %72 : vector<16x4xf32>
    %74 = math.exp %73 : vector<16x4xf32>
    %cst_31 = arith.constant dense<0.000000e+00> : vector<16xf32>
    %75 = vector.multi_reduction <add>, %74, %cst_31 [1] : vector<16x4xf32> to vector<16xf32>
    %76 = vector.shape_cast %75 : vector<16xf32> to vector<16x1xf32>
    %77 = math.log %76 : vector<16x1xf32>
    %78 = arith.addf %77, %71 : vector<16x1xf32>
    %79 = vector.broadcast %78 : vector<16x1xf32> to vector<16x4xf32>
    %80 = arith.subf %69, %79 : vector<16x4xf32>
    %c0_32 = arith.constant 0 : index
    %c0_33 = arith.constant 0 : index
    %81 = vector.load %arg4[%c0_32, %c0_33] : memref<16x4xf32, #tpu.memory_space<vmem>>, vector<16x4xf32>
    tpu.vector_store %arg4[%c0_32, %c0_33], %80 {strides = array<i32>} : memref<16x4xf32, #tpu.memory_space<vmem>>, vector<16x4xf32>,
    return
  }
}

</mosaic_0001>

<llo_original>
// kernel: my_gat_forward.1
$region0: #{my_gat_forward.1}
  #allocation0 [shape = 'u32[]', space=smem, size = 0x4, offset = 0x4, fixed_abs, tag = 'smem constant byte address 0x4 - core index']
  #allocation1 [shape = 'u32[144,128]{1,0:T(1,128)}', space=vmem, size = 0x12000, scoped, tag = 'internal scratch']
  %s0 = inlined_call_operand.vmem [shape: f32[16,8], index: 0, kind: input, shape index: {}]
  %s1 = inlined_call_operand.vmem [shape: f32[16,16], index: 1, kind: input, shape index: {}]
  %s2 = inlined_call_operand.vmem [shape: f32[16,18], index: 2, kind: input, shape index: {}]
  %s3 = inlined_call_operand.vmem [shape: f32[17,6], index: 3, kind: input, shape index: {}]
  %s4 = inlined_call_operand.vmem [shape: f32[16,4], index: 4, kind: output, shape index: {}]
  %s5 = sld [smem:[#allocation0]]
  $region26: #{my_gat_forward.1} parent=0
    _
  %s7 = ssub.s32 1, %s5
  %s8 = scalar_select 0, %s7, %s5
  // Predicated region
  $region2: #{my_gat_forward.1} parent=0 // pred_check
    _
  $region3: #{my_gat_forward.1} parent=0 // pred_check_branch
    %10 = sbr.rel (0) target = $region5
  $region4: #{my_gat_forward.1} parent=0 // pred_region
    _
  $region5: #{my_gat_forward.1} parent=0 // pred_fallthru
    _
  // Predicated region
  $region6: #{my_gat_forward.1} parent=0 // pred_check
    _
  $region7: #{my_gat_forward.1} parent=0 // pred_check_branch
    %12 = sbr.rel (0) target = $region9
  $region8: #{my_gat_forward.1} parent=0 // pred_region
    _
  $region9: #{my_gat_forward.1} parent=0 // pred_fallthru
    _
  // Predicated region
  $region10: #{my_gat_forward.1} parent=0 // pred_check
    _
  $region11: #{my_gat_forward.1} parent=0 // pred_check_branch
    %14 = sbr.rel (0) target = $region13
  $region12: #{my_gat_forward.1} parent=0 // pred_region
    _
  $region13: #{my_gat_forward.1} parent=0 // pred_fallthru
    _
  // Predicated region
  $region14: #{my_gat_forward.1} parent=0 // pred_check
    _
  $region15: #{my_gat_forward.1} parent=0 // pred_check_branch
    %16 = sbr.rel (0) target = $region17
  $region16: #{my_gat_forward.1} parent=0 // pred_region
    _
  $region17: #{my_gat_forward.1} parent=0 // pred_fallthru
    _
  %v17 = vld [vmem:[%s1] sm:$0xff]
  %v18 = vld [vmem:[%s1 + $0x8] sm:$0xff]
  %vm19 = vcmp.gt.f32.partialorder %v17, 0.0
  %vm20 = vcmp.gt.f32.partialorder %v18, 0.0
  %v21 = vsel %vm19, 0.0, -1e+30
  %v22 = vsel %vm20, 0.0, -1e+30
  %v23 = vld [vmem:[%s0] sm:$0xff]
  %v24 = vld [vmem:[%s0 + $0x8] sm:$0xff]
  %v25 = vld [vmem:[%s2] sm:$0xff]
  %v26 = vld [vmem:[%s2 + $0x8] sm:$0x1]
  %v27 = vld [vmem:[%s2 + $0x8] sm:$0xff]
  %vm28 = vcmask 64512
  %v30 = vsel %vm28, %v23, 0
  %v33 = vsel %vm28, %v24, 0
  %35 = vmatprep.subr.mxu0 0.0
  %36 = vmatpush1.msra.mxu0 0.0
  %37 = vmatprep.subr.mxu0 0.0
  %38 = vmatpush1.msra.mxu0 0.0
  %39 = vmatprep.subr.mxu0 0.0
  %40 = vmatpush1.msra.mxu0 0.0
  %41 = vmatprep.subr.mxu0 0.0
  %42 = vmatpush1.msra.mxu0 0.0
  %43 = vmatprep.subr.mxu0 0.0
  %44 = vmatpush1.msra.mxu0 0.0
  %45 = vmatprep.subr.mxu0 0.0
  %46 = vmatpush1.msra.mxu0 0.0
  %47 = vmatprep.subr.mxu0 0.0
  %48 = vmatpush1.msra.mxu0 0.0
  %49 = vmatprep.subr.mxu0 0.0
  %50 = vmatpush1.msra.mxu0 0.0
  %51 = vmatprep.subr.mxu0 0.0
  %52 = vmatpush1.msra.mxu0 0.0
  %53 = vmatprep.subr.mxu0 0.0
  %54 = vmatpush1.msra.mxu0 0.0
  %55 = vmatprep.subr.mxu0 0.0
  %56 = vmatpush1.msra.mxu0 0.0
  %57 = vmatprep.subr.mxu0 0.0
  %58 = vmatpush1.msra.mxu0 0.0
  %59 = vmatprep.subr.mxu0 0.0
  %60 = vmatpush1.msra.mxu0 0.0
  %61 = vmatprep.subr.mxu0 0.0
  %62 = vmatpush1.msra.mxu0 0.0
  %63 = vmatprep.subr.mxu0 0.0
  %64 = vmatpush1.msra.mxu0 0.0
  %65 = vmatprep.subr.mxu0 0.0
  %66 = vmatpush1.msra.mxu0 %v25
  %67 = vmatprep.subr.mxu0 0.0
  %68 = vmatpush2.msra.mxu0 0.0
  %69 = vmatprep.subr.mxu0 0.0
  %70 = vmatpush2.msra.mxu0 0.0
  %71 = vmatprep.subr.mxu0 0.0
  %72 = vmatpush2.msra.mxu0 0.0
  %73 = vmatprep.subr.mxu0 0.0
  %74 = vmatpush2.msra.mxu0 0.0
  %75 = vmatprep.subr.mxu0 0.0
  %76 = vmatpush2.msra.mxu0 0.0
  %77 = vmatprep.subr.mxu0 0.0
  %78 = vmatpush2.msra.mxu0 0.0
  %79 = vmatprep.subr.mxu0 0.0
  %80 = vmatpush2.msra.mxu0 0.0
  %81 = vmatprep.subr.mxu0 0.0
  %82 = vmatpush2.msra.mxu0 0.0
  %83 = vmatprep.subr.mxu0 0.0
  %84 = vmatpush2.msra.mxu0 0.0
  %85 = vmatprep.subr.mxu0 0.0
  %86 = vmatpush2.msra.mxu0 0.0
  %87 = vmatprep.subr.mxu0 0.0
  %88 = vmatpush2.msra.mxu0 0.0
  %89 = vmatprep.subr.mxu0 0.0
  %90 = vmatpush2.msra.mxu0 0.0
  %91 = vmatprep.subr.mxu0 0.0
  %92 = vmatpush2.msra.mxu0 0.0
  %93 = vmatprep.subr.mxu0 0.0
  %94 = vmatpush2.msra.mxu0 0.0
  %95 = vmatprep.subr.mxu0 0.0
  %96 = vmatpush2.msra.mxu0 0.0
  %97 = vmatprep.subr.mxu0 0.0
  %98 = vmatpush2.msra.mxu0 0.0
  %99 = vmatprep.mubr.f32.mxu0 0.0
  %100 = vmatmul.mubr.f32.gmra.mxu0 %v30
  %v101 = vpop.f32.mrf.mxu0
  %v102 = vadd.f32 0.0, %v101
  %v103 = vpop.f32.mrf.mxu0
  %104 = vmatprep.mubr.f32.mxu0 0.0
  %105 = vmatmul.mubr.f32.gmra.mxu0 %v33
  %v106 = vpop.f32.mrf.mxu0
  %v107 = vadd.f32 0.0, %v106
  %v108 = vpop.f32.mrf.mxu0
  %109 = vdwg.mxu0
  %112 = vrot.lane.b32.xlu0 %v25, 112
  %v113 = vpop.permute.xlu0 %112
  %114 = vrot.lane.b32.xlu0 %v27, 112
  %v115 = vpop.permute.xlu0 %114
  %vm118 = vcmask 130048
  %v120 = vsel %vm118, %v102, 0
  %v123 = vsel %vm118, %v107, 0
  %125 = vmatprep.subr.mxu0 0.0
  %126 = vmatpush1.msra.mxu0 0.0
  %127 = vmatprep.subr.mxu0 0.0
  %128 = vmatpush1.msra.mxu0 0.0
  %129 = vmatprep.subr.mxu0 0.0
  %130 = vmatpush1.msra.mxu0 0.0
  %131 = vmatprep.subr.mxu0 0.0
  %132 = vmatpush1.msra.mxu0 0.0
  %133 = vmatprep.subr.mxu0 0.0
  %134 = vmatpush1.msra.mxu0 0.0
  %135 = vmatprep.subr.mxu0 0.0
  %136 = vmatpush1.msra.mxu0 0.0
  %137 = vmatprep.subr.mxu0 0.0
  %138 = vmatpush1.msra.mxu0 0.0
  %139 = vmatprep.subr.mxu0 0.0
  %140 = vmatpush1.msra.mxu0 0.0
  %141 = vmatprep.subr.mxu0 0.0
  %142 = vmatpush1.msra.mxu0 0.0
  %143 = vmatprep.subr.mxu0 0.0
  %144 = vmatpush1.msra.mxu0 0.0
  %145 = vmatprep.subr.mxu0 0.0
  %146 = vmatpush1.msra.mxu0 0.0
  %147 = vmatprep.subr.mxu0 0.0
  %148 = vmatpush1.msra.mxu0 0.0
  %149 = vmatprep.subr.mxu0 0.0
  %150 = vmatpush1.msra.mxu0 0.0
  %151 = vmatprep.subr.mxu0 0.0
  %152 = vmatpush1.msra.mxu0 0.0
  %153 = vmatprep.subr.mxu0 0.0
  %154 = vmatpush1.msra.mxu0 %v115
  %155 = vmatprep.subr.mxu0 0.0
  %156 = vmatpush1.msra.mxu0 %v113
  %157 = vmatprep.subr.mxu0 0.0
  %158 = vmatpush2.msra.mxu0 0.0
  %159 = vmatprep.subr.mxu0 0.0
  %160 = vmatpush2.msra.mxu0 0.0
  %161 = vmatprep.subr.mxu0 0.0
  %162 = vmatpush2.msra.mxu0 0.0
  %163 = vmatprep.subr.mxu0 0.0
  %164 = vmatpush2.msra.mxu0 0.0
  %165 = vmatprep.subr.mxu0 0.0
  %166 = vmatpush2.msra.mxu0 0.0
  %167 = vmatprep.subr.mxu0 0.0
  %168 = vmatpush2.msra.mxu0 0.0
  %169 = vmatprep.subr.mxu0 0.0
  %170 = vmatpush2.msra.mxu0 0.0
  %171 = vmatprep.subr.mxu0 0.0
  %172 = vmatpush2.msra.mxu0 0.0
  %173 = vmatprep.subr.mxu0 0.0
  %174 = vmatpush2.msra.mxu0 0.0
  %175 = vmatprep.subr.mxu0 0.0
  %176 = vmatpush2.msra.mxu0 0.0
  %177 = vmatprep.subr.mxu0 0.0
  %178 = vmatpush2.msra.mxu0 0.0
  %179 = vmatprep.subr.mxu0 0.0
  %180 = vmatpush2.msra.mxu0 0.0
  %181 = vmatprep.subr.mxu0 0.0
  %182 = vmatpush2.msra.mxu0 0.0
  %183 = vmatprep.subr.mxu0 0.0
  %184 = vmatpush2.msra.mxu0 0.0
  %185 = vmatprep.subr.mxu0 0.0
  %186 = vmatpush2.msra.mxu0 0.0
  %187 = vmatprep.subr.mxu0 0.0
  %188 = vmatpush2.msra.mxu0 0.0
  %189 = vmatprep.mubr.f32.mxu0 0.0
  %190 = vmatmul.mubr.f32.gmra.mxu0 %v120
  %v191 = vpop.f32.mrf.mxu0
  %v192 = vadd.f32 0.0, %v191
  %v193 = vpop.f32.mrf.mxu0
  %194 = vmatprep.mubr.f32.mxu0 0.0
  %195 = vmatmul.mubr.f32.gmra.mxu0 %v123
  %v196 = vpop.f32.mrf.mxu0
  %v197 = vadd.f32 0.0, %v196
  %v198 = vpop.f32.mrf.mxu0
  %199 = vdwg.mxu0
  %202 = vrot.lane.b32.xlu0 %v192, 127
  %v203 = vpop.permute.xlu0 %202
  %204 = vrot.lane.b32.xlu0 %v197, 127
  %v205 = vpop.permute.xlu0 %204
  %208 = vxpose.xlu0.b32.start [1/16] %v203, 128
  %209 = vxpose.xlu0.b32.cont [2/16] %v205, 128
  %210 = vxpose.xlu0.b32.cont [3/16] 0.0, 128
  %211 = vxpose.xlu0.b32.cont [4/16] 0.0, 128
  %212 = vxpose.xlu0.b32.cont [5/16] 0.0, 128
  %213 = vxpose.xlu0.b32.cont [6/16] 0.0, 128
  %214 = vxpose.xlu0.b32.cont [7/16] 0.0, 128
  %215 = vxpose.xlu0.b32.cont [8/16] 0.0, 128
  %216 = vxpose.xlu0.b32.cont [9/16] 0.0, 128
  %217 = vxpose.xlu0.b32.cont [10/16] 0.0, 128
  %218 = vxpose.xlu0.b32.cont [11/16] 0.0, 128
  %219 = vxpose.xlu0.b32.cont [12/16] 0.0, 128
  %220 = vxpose.xlu0.b32.cont [13/16] 0.0, 128
  %221 = vxpose.xlu0.b32.cont [14/16] 0.0, 128
  %222 = vxpose.xlu0.b32.cont [15/16] 0.0, 128
  %223 = vxpose.xlu0.b32.end [16/16] 0.0, 128
  %v224 = vpop.trf.xlu0
  %v225 = vpop.trf.xlu0
  %v226 = vpop.trf.xlu0
  %v227 = vpop.trf.xlu0
  %v228 = vpop.trf.xlu0
  %v229 = vpop.trf.xlu0
  %v230 = vpop.trf.xlu0
  %v231 = vpop.trf.xlu0
  %v232 = vpop.trf.xlu0
  %v233 = vpop.trf.xlu0
  %v234 = vpop.trf.xlu0
  %v235 = vpop.trf.xlu0
  %v236 = vpop.trf.xlu0
  %v237 = vpop.trf.xlu0
  %v238 = vpop.trf.xlu0
  %v239 = vpop.trf.xlu0
  %240 = vset.pattern.permute.xlu0 0
  %241 = vperm.xlu0 %240, %v192
  %v242 = vpop.permute.xlu0 %241
  %244 = vset.pattern.permute.xlu0 0
  %245 = vperm.xlu0 %244, %v197
  %v246 = vpop.permute.xlu0 %245
  %v248 = vlaneseq
  %v249 = vshrl.u32 %v248, 7
  %v250 = vsub.s32 0, %v249
  %v251 = vrot.slane %v224, %v250
  %v252 = vadd.f32 %v242, %v251
  %v253 = vadd.f32 %v246, %v251
  %v254 = vmul.f32 %v252, 0.2
  %v255 = vmul.f32 %v253, 0.2
  %v256 = vmax.f32 %v252, %v254
  %v257 = vmax.f32 %v253, %v255
  %v258 = vadd.f32 %v256, %v21
  %v259 = vadd.f32 %v257, %v22
  %v260 = vsel %vm118, %v258, -inf
  %261 = vmax.xlane.f32.xlu0 %v260
  %v262 = vpop.xlane.xlu0 %261
  %v263 = vsel %vm118, %v259, -inf
  %264 = vmax.xlane.f32.xlu0 %v263
  %v265 = vpop.xlane.xlu0 %264
  %v266 = vsub.f32 %v258, %v262
  %v267 = vsub.f32 %v259, %v265
  %v268 = vmul.f32 %v266, 1.442695
  %v269 = vpow.pop %v268
  %v270 = vmul.f32 %v267, 1.442695
  %v271 = vpow.pop %v270
  %v273 = vsel %vm118, %v269, 0
  %v276 = vsel %vm118, %v271, 0
  %278 = vmatprep.subr.mxu0 0.0
  %279 = vmatpush1.msra.mxu0 0.0
  %280 = vmatprep.subr.mxu0 0.0
  %281 = vmatpush1.msra.mxu0 0.0
  %282 = vmatprep.subr.mxu0 0.0
  %283 = vmatpush1.msra.mxu0 0.0
  %284 = vmatprep.subr.mxu0 0.0
  %285 = vmatpush1.msra.mxu0 0.0
  %286 = vmatprep.subr.mxu0 0.0
  %287 = vmatpush1.msra.mxu0 0.0
  %288 = vmatprep.subr.mxu0 0.0
  %289 = vmatpush1.msra.mxu0 0.0
  %290 = vmatprep.subr.mxu0 0.0
  %291 = vmatpush1.msra.mxu0 0.0
  %292 = vmatprep.subr.mxu0 0.0
  %293 = vmatpush1.msra.mxu0 0.0
  %294 = vmatprep.subr.mxu0 0.0
  %295 = vmatpush1.msra.mxu0 0.0
  %296 = vmatprep.subr.mxu0 0.0
  %297 = vmatpush1.msra.mxu0 0.0
  %298 = vmatprep.subr.mxu0 0.0
  %299 = vmatpush1.msra.mxu0 0.0
  %300 = vmatprep.subr.mxu0 0.0
  %301 = vmatpush1.msra.mxu0 0.0
  %302 = vmatprep.subr.mxu0 0.0
  %303 = vmatpush1.msra.mxu0 0.0
  %304 = vmatprep.subr.mxu0 0.0
  %305 = vmatpush1.msra.mxu0 0.0
  %306 = vmatprep.subr.mxu0 0.0
  %307 = vmatpush1.msra.mxu0 %v107
  %308 = vmatprep.subr.mxu0 0.0
  %309 = vmatpush1.msra.mxu0 %v102
  %310 = vmatprep.subr.mxu0 0.0
  %311 = vmatpush2.msra.mxu0 0.0
  %312 = vmatprep.subr.mxu0 0.0
  %313 = vmatpush2.msra.mxu0 0.0
  %314 = vmatprep.subr.mxu0 0.0
  %315 = vmatpush2.msra.mxu0 0.0
  %316 = vmatprep.subr.mxu0 0.0
  %317 = vmatpush2.msra.mxu0 0.0
  %318 = vmatprep.subr.mxu0 0.0
  %319 = vmatpush2.msra.mxu0 0.0
  %320 = vmatprep.subr.mxu0 0.0
  %321 = vmatpush2.msra.mxu0 0.0
  %322 = vmatprep.subr.mxu0 0.0
  %323 = vmatpush2.msra.mxu0 0.0
  %324 = vmatprep.subr.mxu0 0.0
  %325 = vmatpush2.msra.mxu0 0.0
  %326 = vmatprep.subr.mxu0 0.0
  %327 = vmatpush2.msra.mxu0 0.0
  %328 = vmatprep.subr.mxu0 0.0
  %329 = vmatpush2.msra.mxu0 0.0
  %330 = vmatprep.subr.mxu0 0.0
  %331 = vmatpush2.msra.mxu0 0.0
  %332 = vmatprep.subr.mxu0 0.0
  %333 = vmatpush2.msra.mxu0 0.0
  %334 = vmatprep.subr.mxu0 0.0
  %335 = vmatpush2.msra.mxu0 0.0
  %336 = vmatprep.subr.mxu0 0.0
  %337 = vmatpush2.msra.mxu0 0.0
  %338 = vmatprep.subr.mxu0 0.0
  %339 = vmatpush2.msra.mxu0 0.0
  %340 = vmatprep.subr.mxu0 0.0
  %341 = vmatpush2.msra.mxu0 0.0
  %342 = vmatprep.mubr.f32.mxu0 0.0
  %343 = vmatmul.mubr.f32.gmra.mxu0 %v273
  %v344 = vpop.f32.mrf.mxu0
  %v345 = vadd.f32 0.0, %v344
  %v346 = vpop.f32.mrf.mxu0
  %347 = vmatprep.mubr.f32.mxu0 0.0
  %348 = vmatmul.mubr.f32.gmra.mxu0 %v276
  %v349 = vpop.f32.mrf.mxu0
  %v350 = vadd.f32 0.0, %v349
  %v351 = vpop.f32.mrf.mxu0
  %352 = vdwg.mxu0
  %353 = vmatprep.subr.mxu0 0.0
  %354 = vmatpush1.msra.mxu0 0.0
  %355 = vmatprep.subr.mxu0 0.0
  %356 = vmatpush1.msra.mxu0 0.0
  %357 = vmatprep.subr.mxu0 0.0
  %358 = vmatpush1.msra.mxu0 0.0
  %359 = vmatprep.subr.mxu0 0.0
  %360 = vmatpush1.msra.mxu0 0.0
  %361 = vmatprep.subr.mxu0 0.0
  %362 = vmatpush1.msra.mxu0 0.0
  %363 = vmatprep.subr.mxu0 0.0
  %364 = vmatpush1.msra.mxu0 0.0
  %365 = vmatprep.subr.mxu0 0.0
  %366 = vmatpush1.msra.mxu0 0.0
  %367 = vmatprep.subr.mxu0 0.0
  %368 = vmatpush1.msra.mxu0 0.0
  %369 = vmatprep.subr.mxu0 0.0
  %370 = vmatpush1.msra.mxu0 0.0
  %371 = vmatprep.subr.mxu0 0.0
  %372 = vmatpush1.msra.mxu0 0.0
  %373 = vmatprep.subr.mxu0 0.0
  %374 = vmatpush1.msra.mxu0 0.0
  %375 = vmatprep.subr.mxu0 0.0
  %376 = vmatpush1.msra.mxu0 0.0
  %377 = vmatprep.subr.mxu0 0.0
  %378 = vmatpush1.msra.mxu0 0.0
  %379 = vmatprep.subr.mxu0 0.0
  %380 = vmatpush1.msra.mxu0 0.0
  %381 = vmatprep.subr.mxu0 0.0
  %382 = vmatpush1.msra.mxu0 1.0
  %383 = vmatprep.subr.mxu0 0.0
  %384 = vmatpush1.msra.mxu0 1.0
  %385 = vmatprep.subr.mxu0 0.0
  %386 = vmatpush2.msra.mxu0 0.0
  %387 = vmatprep.subr.mxu0 0.0
  %388 = vmatpush2.msra.mxu0 0.0
  %389 = vmatprep.subr.mxu0 0.0
  %390 = vmatpush2.msra.mxu0 0.0
  %391 = vmatprep.subr.mxu0 0.0
  %392 = vmatpush2.msra.mxu0 0.0
  %393 = vmatprep.subr.mxu0 0.0
  %394 = vmatpush2.msra.mxu0 0.0
  %395 = vmatprep.subr.mxu0 0.0
  %396 = vmatpush2.msra.mxu0 0.0
  %397 = vmatprep.subr.mxu0 0.0
  %398 = vmatpush2.msra.mxu0 0.0
  %399 = vmatprep.subr.mxu0 0.0
  %400 = vmatpush2.msra.mxu0 0.0
  %401 = vmatprep.subr.mxu0 0.0
  %402 = vmatpush2.msra.mxu0 0.0
  %403 = vmatprep.subr.mxu0 0.0
  %404 = vmatpush2.msra.mxu0 0.0
  %405 = vmatprep.subr.mxu0 0.0
  %406 = vmatpush2.msra.mxu0 0.0
  %407 = vmatprep.subr.mxu0 0.0
  %408 = vmatpush2.msra.mxu0 0.0
  %409 = vmatprep.subr.mxu0 0.0
  %410 = vmatpush2.msra.mxu0 0.0
  %411 = vmatprep.subr.mxu0 0.0
  %412 = vmatpush2.msra.mxu0 0.0
  %413 = vmatprep.subr.mxu0 0.0
  %414 = vmatpush2.msra.mxu0 0.0
  %415 = vmatprep.subr.mxu0 0.0
  %416 = vmatpush2.msra.mxu0 0.0
  %417 = vmatprep.mubr.f32.mxu0 0.0
  %418 = vmatmul.mubr.f32.gmra.mxu0 %v273
  %v419 = vpop.f32.mrf.mxu0
  %v420 = vadd.f32 0.0, %v419
  %v421 = vpop.f32.mrf.mxu0
  %422 = vmatprep.mubr.f32.mxu0 0.0
  %423 = vmatmul.mubr.f32.gmra.mxu0 %v276
  %v424 = vpop.f32.mrf.mxu0
  %v425 = vadd.f32 0.0, %v424
  %v426 = vpop.f32.mrf.mxu0
  %427 = vdwg.mxu0
  %v428 = vrcp.pop %v420
  %v429 = vrcp.pop %v425
  %431 = vset.pattern.permute.xlu0 0
  %432 = vperm.xlu0 %431, %v428
  %v433 = vpop.permute.xlu0 %432
  %436 = vset.pattern.permute.xlu0 0
  %437 = vperm.xlu0 %436, %v429
  %v438 = vpop.permute.xlu0 %437
  %v440 = vmul.f32 %v345, %v433
  %v441 = vmul.f32 %v350, %v438
  %v442 = vlaneseq
  %v443 = vshrl.u32 %v442, 7
  %v444 = vsub.s32 0, %v443
  %v445 = vrot.slane %v26, %v444
  %v446 = vadd.f32 %v440, %v445
  %v447 = vadd.f32 %v441, %v445
  %vm448 = vcmp.gt.f32.partialorder %v446, 0.0
  %vm449 = vcmp.gt.f32.partialorder %v447, 0.0
  %v450 = vmin.f32 %v446, 0.0
  %v451 = vmin.f32 %v447, 0.0
  %v452 = vmul.f32 %v450, 1.442695
  %v453 = vpow.pop %v452
  %v454 = vmul.f32 %v451, 1.442695
  %v455 = vpow.pop %v454
  %v456 = vsub.f32 %v453, 1.0
  %v457 = vsub.f32 %v455, 1.0
  %v458 = vsel %vm448, %v446, %v456
  %v459 = vsel %vm449, %v447, %v457
  %v460 = vld [vmem:[%s3] sm:$0xff]
  %v461 = vld [vmem:[%s3 + $0x8] sm:$0xff]
  %v462 = vld [vmem:[%s3 + $0x10] sm:$0x1]
  %v463 = vld [vmem:[%s3] sm:$0xf]
  %v465 = vsel %vm118, %v458, 0
  %v468 = vsel %vm118, %v459, 0
  %470 = vmatprep.subr.mxu0 0.0
  %471 = vmatpush1.msra.mxu0 0.0
  %472 = vmatprep.subr.mxu0 0.0
  %473 = vmatpush1.msra.mxu0 0.0
  %474 = vmatprep.subr.mxu0 0.0
  %475 = vmatpush1.msra.mxu0 0.0
  %476 = vmatprep.subr.mxu0 0.0
  %477 = vmatpush1.msra.mxu0 0.0
  %478 = vmatprep.subr.mxu0 0.0
  %479 = vmatpush1.msra.mxu0 0.0
  %480 = vmatprep.subr.mxu0 0.0
  %481 = vmatpush1.msra.mxu0 0.0
  %482 = vmatprep.subr.mxu0 0.0
  %483 = vmatpush1.msra.mxu0 0.0
  %484 = vmatprep.subr.mxu0 0.0
  %485 = vmatpush1.msra.mxu0 0.0
  %486 = vmatprep.subr.mxu0 0.0
  %487 = vmatpush1.msra.mxu0 0.0
  %488 = vmatprep.subr.mxu0 0.0
  %489 = vmatpush1.msra.mxu0 0.0
  %490 = vmatprep.subr.mxu0 0.0
  %491 = vmatpush1.msra.mxu0 0.0
  %492 = vmatprep.subr.mxu0 0.0
  %493 = vmatpush1.msra.mxu0 0.0
  %494 = vmatprep.subr.mxu0 0.0
  %495 = vmatpush1.msra.mxu0 0.0
  %496 = vmatprep.subr.mxu0 0.0
  %497 = vmatpush1.msra.mxu0 0.0
  %498 = vmatprep.subr.mxu0 0.0
  %499 = vmatpush1.msra.mxu0 %v461
  %500 = vmatprep.subr.mxu0 0.0
  %501 = vmatpush1.msra.mxu0 %v460
  %502 = vmatprep.subr.mxu0 0.0
  %503 = vmatpush2.msra.mxu0 0.0
  %504 = vmatprep.subr.mxu0 0.0
  %505 = vmatpush2.msra.mxu0 0.0
  %506 = vmatprep.subr.mxu0 0.0
  %507 = vmatpush2.msra.mxu0 0.0
  %508 = vmatprep.subr.mxu0 0.0
  %509 = vmatpush2.msra.mxu0 0.0
  %510 = vmatprep.subr.mxu0 0.0
  %511 = vmatpush2.msra.mxu0 0.0
  %512 = vmatprep.subr.mxu0 0.0
  %513 = vmatpush2.msra.mxu0 0.0
  %514 = vmatprep.subr.mxu0 0.0
  %515 = vmatpush2.msra.mxu0 0.0
  %516 = vmatprep.subr.mxu0 0.0
  %517 = vmatpush2.msra.mxu0 0.0
  %518 = vmatprep.subr.mxu0 0.0
  %519 = vmatpush2.msra.mxu0 0.0
  %520 = vmatprep.subr.mxu0 0.0
  %521 = vmatpush2.msra.mxu0 0.0
  %522 = vmatprep.subr.mxu0 0.0
  %523 = vmatpush2.msra.mxu0 0.0
  %524 = vmatprep.subr.mxu0 0.0
  %525 = vmatpush2.msra.mxu0 0.0
  %526 = vmatprep.subr.mxu0 0.0
  %527 = vmatpush2.msra.mxu0 0.0
  %528 = vmatprep.subr.mxu0 0.0
  %529 = vmatpush2.msra.mxu0 0.0
  %530 = vmatprep.subr.mxu0 0.0
  %531 = vmatpush2.msra.mxu0 0.0
  %532 = vmatprep.subr.mxu0 0.0
  %533 = vmatpush2.msra.mxu0 0.0
  %534 = vmatprep.mubr.f32.mxu0 0.0
  %535 = vmatmul.mubr.f32.gmra.mxu0 %v465
  %v536 = vpop.f32.mrf.mxu0
  %v537 = vadd.f32 0.0, %v536
  %v538 = vpop.f32.mrf.mxu0
  %539 = vmatprep.mubr.f32.mxu0 0.0
  %540 = vmatmul.mubr.f32.gmra.mxu0 %v468
  %v541 = vpop.f32.mrf.mxu0
  %v542 = vadd.f32 0.0, %v541
  %v543 = vpop.f32.mrf.mxu0
  %544 = vdwg.mxu0
  %546 = vrot.lane.b32.xlu0 %v463, 124
  %v547 = vpop.permute.xlu0 %546
  %vm548 = vcmask 31744
  %v550 = vsel %vm548, %v537, 0
  %v553 = vsel %vm548, %v542, 0
  %vm555 = vcmask 1043456
  %v556 = vsel %vm555, %v547, 0
  %558 = vmatprep.subr.mxu0 0.0
  %559 = vmatpush1.msra.mxu0 0.0
  %560 = vmatprep.subr.mxu0 0.0
  %561 = vmatpush1.msra.mxu0 0.0
  %562 = vmatprep.subr.mxu0 0.0
  %563 = vmatpush1.msra.mxu0 0.0
  %564 = vmatprep.subr.mxu0 0.0
  %565 = vmatpush1.msra.mxu0 0.0
  %566 = vmatprep.subr.mxu0 0.0
  %567 = vmatpush1.msra.mxu0 0.0
  %568 = vmatprep.subr.mxu0 0.0
  %569 = vmatpush1.msra.mxu0 0.0
  %570 = vmatprep.subr.mxu0 0.0
  %571 = vmatpush1.msra.mxu0 0.0
  %572 = vmatprep.subr.mxu0 0.0
  %573 = vmatpush1.msra.mxu0 0.0
  %574 = vmatprep.subr.mxu0 0.0
  %575 = vmatpush1.msra.mxu0 0.0
  %576 = vmatprep.subr.mxu0 0.0
  %577 = vmatpush1.msra.mxu0 0.0
  %578 = vmatprep.subr.mxu0 0.0
  %579 = vmatpush1.msra.mxu0 0.0
  %580 = vmatprep.subr.mxu0 0.0
  %581 = vmatpush1.msra.mxu0 0.0
  %582 = vmatprep.subr.mxu0 0.0
  %583 = vmatpush1.msra.mxu0 0.0
  %584 = vmatprep.subr.mxu0 0.0
  %585 = vmatpush1.msra.mxu0 0.0
  %586 = vmatprep.subr.mxu0 0.0
  %587 = vmatpush1.msra.mxu0 0.0
  %588 = vmatprep.subr.mxu0 0.0
  %589 = vmatpush1.msra.mxu0 %v556
  %590 = vmatprep.subr.mxu0 0.0
  %591 = vmatpush2.msra.mxu0 0.0
  %592 = vmatprep.subr.mxu0 0.0
  %593 = vmatpush2.msra.mxu0 0.0
  %594 = vmatprep.subr.mxu0 0.0
  %595 = vmatpush2.msra.mxu0 0.0
  %596 = vmatprep.subr.mxu0 0.0
  %597 = vmatpush2.msra.mxu0 0.0
  %598 = vmatprep.subr.mxu0 0.0
  %599 = vmatpush2.msra.mxu0 0.0
  %600 = vmatprep.subr.mxu0 0.0
  %601 = vmatpush2.msra.mxu0 0.0
  %602 = vmatprep.subr.mxu0 0.0
  %603 = vmatpush2.msra.mxu0 0.0
  %604 = vmatprep.subr.mxu0 0.0
  %605 = vmatpush2.msra.mxu0 0.0
  %606 = vmatprep.subr.mxu0 0.0
  %607 = vmatpush2.msra.mxu0 0.0
  %608 = vmatprep.subr.mxu0 0.0
  %609 = vmatpush2.msra.mxu0 0.0
  %610 = vmatprep.subr.mxu0 0.0
  %611 = vmatpush2.msra.mxu0 0.0
  %612 = vmatprep.subr.mxu0 0.0
  %613 = vmatpush2.msra.mxu0 0.0
  %614 = vmatprep.subr.mxu0 0.0
  %615 = vmatpush2.msra.mxu0 0.0
  %616 = vmatprep.subr.mxu0 0.0
  %617 = vmatpush2.msra.mxu0 0.0
  %618 = vmatprep.subr.mxu0 0.0
  %619 = vmatpush2.msra.mxu0 0.0
  %620 = vmatprep.subr.mxu0 0.0
  %621 = vmatpush2.msra.mxu0 0.0
  %622 = vmatprep.mubr.f32.mxu0 0.0
  %623 = vmatmul.mubr.f32.gmra.mxu0 %v550
  %v624 = vpop.f32.mrf.mxu0
  %v625 = vadd.f32 0.0, %v624
  %v626 = vpop.f32.mrf.mxu0
  %627 = vmatprep.mubr.f32.mxu0 0.0
  %628 = vmatmul.mubr.f32.gmra.mxu0 %v553
  %v629 = vpop.f32.mrf.mxu0
  %v630 = vadd.f32 0.0, %v629
  %v631 = vpop.f32.mrf.mxu0
  %632 = vdwg.mxu0
  %635 = vrot.lane.b32.xlu0 %v625, 127
  %v636 = vpop.permute.xlu0 %635
  %637 = vrot.lane.b32.xlu0 %v630, 127
  %v638 = vpop.permute.xlu0 %637
  %641 = vxpose.xlu0.b32.start [1/16] %v636, 128
  %642 = vxpose.xlu0.b32.cont [2/16] %v638, 128
  %643 = vxpose.xlu0.b32.cont [3/16] 0.0, 128
  %644 = vxpose.xlu0.b32.cont [4/16] 0.0, 128
  %645 = vxpose.xlu0.b32.cont [5/16] 0.0, 128
  %646 = vxpose.xlu0.b32.cont [6/16] 0.0, 128
  %647 = vxpose.xlu0.b32.cont [7/16] 0.0, 128
  %648 = vxpose.xlu0.b32.cont [8/16] 0.0, 128
  %649 = vxpose.xlu0.b32.cont [9/16] 0.0, 128
  %650 = vxpose.xlu0.b32.cont [10/16] 0.0, 128
  %651 = vxpose.xlu0.b32.cont [11/16] 0.0, 128
  %652 = vxpose.xlu0.b32.cont [12/16] 0.0, 128
  %653 = vxpose.xlu0.b32.cont [13/16] 0.0, 128
  %654 = vxpose.xlu0.b32.cont [14/16] 0.0, 128
  %655 = vxpose.xlu0.b32.cont [15/16] 0.0, 128
  %656 = vxpose.xlu0.b32.end [16/16] 0.0, 128
  %v657 = vpop.trf.xlu0
  %v658 = vpop.trf.xlu0
  %v659 = vpop.trf.xlu0
  %v660 = vpop.trf.xlu0
  %v661 = vpop.trf.xlu0
  %v662 = vpop.trf.xlu0
  %v663 = vpop.trf.xlu0
  %v664 = vpop.trf.xlu0
  %v665 = vpop.trf.xlu0
  %v666 = vpop.trf.xlu0
  %v667 = vpop.trf.xlu0
  %v668 = vpop.trf.xlu0
  %v669 = vpop.trf.xlu0
  %v670 = vpop.trf.xlu0
  %v671 = vpop.trf.xlu0
  %v672 = vpop.trf.xlu0
  %673 = vset.pattern.permute.xlu0 0
  %674 = vperm.xlu0 %673, %v625
  %v675 = vpop.permute.xlu0 %674
  %677 = vset.pattern.permute.xlu0 0
  %678 = vperm.xlu0 %677, %v630
  %v679 = vpop.permute.xlu0 %678
  %v681 = vlaneseq
  %v682 = vshrl.u32 %v681, 7
  %v683 = vsub.s32 0, %v682
  %v684 = vrot.slane %v657, %v683
  %v685 = vadd.f32 %v675, %v684
  %v686 = vadd.f32 %v679, %v684
  %v687 = vmul.f32 %v685, 0.2
  %v688 = vmul.f32 %v686, 0.2
  %v689 = vmax.f32 %v685, %v687
  %v690 = vmax.f32 %v686, %v688
  %v691 = vadd.f32 %v689, %v21
  %v692 = vadd.f32 %v690, %v22
  %v693 = vsel %vm118, %v691, -inf
  %694 = vmax.xlane.f32.xlu0 %v693
  %v695 = vpop.xlane.xlu0 %694
  %v696 = vsel %vm118, %v692, -inf
  %697 = vmax.xlane.f32.xlu0 %v696
  %v698 = vpop.xlane.xlu0 %697
  %v699 = vsub.f32 %v691, %v695
  %v700 = vsub.f32 %v692, %v698
  %v701 = vmul.f32 %v699, 1.442695
  %v702 = vpow.pop %v701
  %v703 = vmul.f32 %v700, 1.442695
  %v704 = vpow.pop %v703
  %v706 = vsel %vm118, %v702, 0
  %v709 = vsel %vm118, %v704, 0
  %711 = vmatprep.subr.mxu0 0.0
  %712 = vmatpush1.msra.mxu0 0.0
  %713 = vmatprep.subr.mxu0 0.0
  %714 = vmatpush1.msra.mxu0 0.0
  %715 = vmatprep.subr.mxu0 0.0
  %716 = vmatpush1.msra.mxu0 0.0
  %717 = vmatprep.subr.mxu0 0.0
  %718 = vmatpush1.msra.mxu0 0.0
  %719 = vmatprep.subr.mxu0 0.0
  %720 = vmatpush1.msra.mxu0 0.0
  %721 = vmatprep.subr.mxu0 0.0
  %722 = vmatpush1.msra.mxu0 0.0
  %723 = vmatprep.subr.mxu0 0.0
  %724 = vmatpush1.msra.mxu0 0.0
  %725 = vmatprep.subr.mxu0 0.0
  %726 = vmatpush1.msra.mxu0 0.0
  %727 = vmatprep.subr.mxu0 0.0
  %728 = vmatpush1.msra.mxu0 0.0
  %729 = vmatprep.subr.mxu0 0.0
  %730 = vmatpush1.msra.mxu0 0.0
  %731 = vmatprep.subr.mxu0 0.0
  %732 = vmatpush1.msra.mxu0 0.0
  %733 = vmatprep.subr.mxu0 0.0
  %734 = vmatpush1.msra.mxu0 0.0
  %735 = vmatprep.subr.mxu0 0.0
  %736 = vmatpush1.msra.mxu0 0.0
  %737 = vmatprep.subr.mxu0 0.0
  %738 = vmatpush1.msra.mxu0 0.0
  %739 = vmatprep.subr.mxu0 0.0
  %740 = vmatpush1.msra.mxu0 %v542
  %741 = vmatprep.subr.mxu0 0.0
  %742 = vmatpush1.msra.mxu0 %v537
  %743 = vmatprep.subr.mxu0 0.0
  %744 = vmatpush2.msra.mxu0 0.0
  %745 = vmatprep.subr.mxu0 0.0
  %746 = vmatpush2.msra.mxu0 0.0
  %747 = vmatprep.subr.mxu0 0.0
  %748 = vmatpush2.msra.mxu0 0.0
  %749 = vmatprep.subr.mxu0 0.0
  %750 = vmatpush2.msra.mxu0 0.0
  %751 = vmatprep.subr.mxu0 0.0
  %752 = vmatpush2.msra.mxu0 0.0
  %753 = vmatprep.subr.mxu0 0.0
  %754 = vmatpush2.msra.mxu0 0.0
  %755 = vmatprep.subr.mxu0 0.0
  %756 = vmatpush2.msra.mxu0 0.0
  %757 = vmatprep.subr.mxu0 0.0
  %758 = vmatpush2.msra.mxu0 0.0
  %759 = vmatprep.subr.mxu0 0.0
  %760 = vmatpush2.msra.mxu0 0.0
  %761 = vmatprep.subr.mxu0 0.0
  %762 = vmatpush2.msra.mxu0 0.0
  %763 = vmatprep.subr.mxu0 0.0
  %764 = vmatpush2.msra.mxu0 0.0
  %765 = vmatprep.subr.mxu0 0.0
  %766 = vmatpush2.msra.mxu0 0.0
  %767 = vmatprep.subr.mxu0 0.0
  %768 = vmatpush2.msra.mxu0 0.0
  %769 = vmatprep.subr.mxu0 0.0
  %770 = vmatpush2.msra.mxu0 0.0
  %771 = vmatprep.subr.mxu0 0.0
  %772 = vmatpush2.msra.mxu0 0.0
  %773 = vmatprep.subr.mxu0 0.0
  %774 = vmatpush2.msra.mxu0 0.0
  %775 = vmatprep.mubr.f32.mxu0 0.0
  %776 = vmatmul.mubr.f32.gmra.mxu0 %v706
  %v777 = vpop.f32.mrf.mxu0
  %v778 = vadd.f32 0.0, %v777
  %v779 = vpop.f32.mrf.mxu0
  %780 = vmatprep.mubr.f32.mxu0 0.0
  %781 = vmatmul.mubr.f32.gmra.mxu0 %v709
  %v782 = vpop.f32.mrf.mxu0
  %v783 = vadd.f32 0.0, %v782
  %v784 = vpop.f32.mrf.mxu0
  %785 = vdwg.mxu0
  %786 = vmatprep.subr.mxu0 0.0
  %787 = vmatpush1.msra.mxu0 0.0
  %788 = vmatprep.subr.mxu0 0.0
  %789 = vmatpush1.msra.mxu0 0.0
  %790 = vmatprep.subr.mxu0 0.0
  %791 = vmatpush1.msra.mxu0 0.0
  %792 = vmatprep.subr.mxu0 0.0
  %793 = vmatpush1.msra.mxu0 0.0
  %794 = vmatprep.subr.mxu0 0.0
  %795 = vmatpush1.msra.mxu0 0.0
  %796 = vmatprep.subr.mxu0 0.0
  %797 = vmatpush1.msra.mxu0 0.0
  %798 = vmatprep.subr.mxu0 0.0
  %799 = vmatpush1.msra.mxu0 0.0
  %800 = vmatprep.subr.mxu0 0.0
  %801 = vmatpush1.msra.mxu0 0.0
  %802 = vmatprep.subr.mxu0 0.0
  %803 = vmatpush1.msra.mxu0 0.0
  %804 = vmatprep.subr.mxu0 0.0
  %805 = vmatpush1.msra.mxu0 0.0
  %806 = vmatprep.subr.mxu0 0.0
  %807 = vmatpush1.msra.mxu0 0.0
  %808 = vmatprep.subr.mxu0 0.0
  %809 = vmatpush1.msra.mxu0 0.0
  %810 = vmatprep.subr.mxu0 0.0
  %811 = vmatpush1.msra.mxu0 0.0
  %812 = vmatprep.subr.mxu0 0.0
  %813 = vmatpush1.msra.mxu0 0.0
  %814 = vmatprep.subr.mxu0 0.0
  %815 = vmatpush1.msra.mxu0 1.0
  %816 = vmatprep.subr.mxu0 0.0
  %817 = vmatpush1.msra.mxu0 1.0
  %818 = vmatprep.subr.mxu0 0.0
  %819 = vmatpush2.msra.mxu0 0.0
  %820 = vmatprep.subr.mxu0 0.0
  %821 = vmatpush2.msra.mxu0 0.0
  %822 = vmatprep.subr.mxu0 0.0
  %823 = vmatpush2.msra.mxu0 0.0
  %824 = vmatprep.subr.mxu0 0.0
  %825 = vmatpush2.msra.mxu0 0.0
  %826 = vmatprep.subr.mxu0 0.0
  %827 = vmatpush2.msra.mxu0 0.0
  %828 = vmatprep.subr.mxu0 0.0
  %829 = vmatpush2.msra.mxu0 0.0
  %830 = vmatprep.subr.mxu0 0.0
  %831 = vmatpush2.msra.mxu0 0.0
  %832 = vmatprep.subr.mxu0 0.0
  %833 = vmatpush2.msra.mxu0 0.0
  %834 = vmatprep.subr.mxu0 0.0
  %835 = vmatpush2.msra.mxu0 0.0
  %836 = vmatprep.subr.mxu0 0.0
  %837 = vmatpush2.msra.mxu0 0.0
  %838 = vmatprep.subr.mxu0 0.0
  %839 = vmatpush2.msra.mxu0 0.0
  %840 = vmatprep.subr.mxu0 0.0
  %841 = vmatpush2.msra.mxu0 0.0
  %842 = vmatprep.subr.mxu0 0.0
  %843 = vmatpush2.msra.mxu0 0.0
  %844 = vmatprep.subr.mxu0 0.0
  %845 = vmatpush2.msra.mxu0 0.0
  %846 = vmatprep.subr.mxu0 0.0
  %847 = vmatpush2.msra.mxu0 0.0
  %848 = vmatprep.subr.mxu0 0.0
  %849 = vmatpush2.msra.mxu0 0.0
  %850 = vmatprep.mubr.f32.mxu0 0.0
  %851 = vmatmul.mubr.f32.gmra.mxu0 %v706
  %v852 = vpop.f32.mrf.mxu0
  %v853 = vadd.f32 0.0, %v852
  %v854 = vpop.f32.mrf.mxu0
  %855 = vmatprep.mubr.f32.mxu0 0.0
  %856 = vmatmul.mubr.f32.gmra.mxu0 %v709
  %v857 = vpop.f32.mrf.mxu0
  %v858 = vadd.f32 0.0, %v857
  %v859 = vpop.f32.mrf.mxu0
  %860 = vdwg.mxu0
  %v861 = vrcp.pop %v853
  %v862 = vrcp.pop %v858
  %864 = vset.pattern.permute.xlu0 0
  %865 = vperm.xlu0 %864, %v861
  %v866 = vpop.permute.xlu0 %865
  %869 = vset.pattern.permute.xlu0 0
  %870 = vperm.xlu0 %869, %v862
  %v871 = vpop.permute.xlu0 %870
  %v873 = vmul.f32 %v778, %v866
  %v874 = vmul.f32 %v783, %v871
  %v875 = vlaneseq
  %v876 = vshrl.u32 %v875, 7
  %v877 = vsub.s32 0, %v876
  %v878 = vrot.slane %v462, %v877
  %v879 = vadd.f32 %v873, %v878
  %v880 = vadd.f32 %v874, %v878
  %v881 = vsel %vm548, %v879, -inf
  %882 = vmax.xlane.f32.xlu0 %v881
  %v883 = vpop.xlane.xlu0 %882
  %v884 = vsel %vm548, %v880, -inf
  %885 = vmax.xlane.f32.xlu0 %v884
  %v886 = vpop.xlane.xlu0 %885
  %v887 = vsub.f32 %v879, %v883
  %v888 = vsub.f32 %v880, %v886
  %v889 = vmul.f32 %v887, 1.442695
  %v890 = vpow.pop %v889
  %v891 = vmul.f32 %v888, 1.442695
  %v892 = vpow.pop %v891
  %v893 = vsel %vm548, %v890, 0.0
  %894 = vadd.xlane.f32.xlu0 %v893
  %v895 = vpop.xlane.xlu0 %894
  %v896 = vsel %vm548, %v892, 0.0
  %897 = vadd.xlane.f32.xlu0 %v896
  %v898 = vpop.xlane.xlu0 %897
  %v899 = vlog2.pop %v895
  %v900 = vmul.f32 %v899, 0.6931472
  %v901 = vlog2.pop %v898
  %v902 = vmul.f32 %v901, 0.6931472
  %v903 = vadd.f32 %v900, %v883
  %v904 = vadd.f32 %v902, %v886
  %v905 = vsub.f32 %v879, %v903
  %v906 = vsub.f32 %v880, %v904
  %907 = vst.msk [vmem:[%s4] sm:$0xff] %vm548, %v905
  %908 = vst.msk [vmem:[%s4 + $0x8] sm:$0xff] %vm548, %v906
  // Predicated region
  $region18: #{my_gat_forward.1} parent=0 // pred_check
    _
  $region19: #{my_gat_forward.1} parent=0 // pred_check_branch
    %910 = sbr.rel (0) target = $region21
  $region20: #{my_gat_forward.1} parent=0 // pred_region
    _
  $region21: #{my_gat_forward.1} parent=0 // pred_fallthru
    _
  // Predicated region
  $region22: #{my_gat_forward.1} parent=0 // pred_check
    _
  $region23: #{my_gat_forward.1} parent=0 // pred_check_branch
    %912 = sbr.rel (0) target = $region25
  $region24: #{my_gat_forward.1} parent=0 // pred_region
    _
  $region25: #{my_gat_forward.1} parent=0 // pred_fallthru
    _

</llo_original>
